<compile_context>
chip_gen: v5e
topology: v5e:2x2
jax: 0.10.0
libtpu: 0.0.40
codegen_flags: <defaults>
</compile_context>

<pallas_src>
import numpy as np
import jax
import jax.numpy as jnp
from jax.experimental import pallas as pl
from jax.experimental.pallas import tpu as pltpu

LEAKY_SLOPE = 0.01   # nn.LeakyReLU() default
BN_EPS = 1e-5        # nn.BatchNorm2d default
LANE = 128


def _round_up(x, m):
    return (x + m - 1) // m * m


def _row_chunk(h):
    for c in (8, 4, 2, 1):
        if h % c == 0:
            return c
    return 1


# ----------------------------- BN batch-statistics kernel -----------------------------

def bn_stats(x_flat3):
    """Per-channel mean and 1/sqrt(var+eps) over (N, M, C), tiled over N with
    an in-VMEM accumulator (bounded VMEM per step)."""
    n, m, c = x_flat3.shape
    denom = float(n * m)

    def kernel(x_ref, mean_ref, invstd_ref):
        b = pl.program_id(0)

        @pl.when(b == 0)
        def _():
            mean_ref[...] = jnp.zeros_like(mean_ref)
            invstd_ref[...] = jnp.zeros_like(invstd_ref)

        v = x_ref[0]                                           # (M, C)
        mean_ref[...] += jnp.sum(v, axis=0, keepdims=True)     # running sum
        invstd_ref[...] += jnp.sum(v * v, axis=0, keepdims=True)

        @pl.when(b == pl.num_programs(0) - 1)
        def _():
            mu = mean_ref[...] / denom
            var = invstd_ref[...] / denom - mu * mu
            var = jnp.maximum(var, 0.0)   # guard E[x^2]-mu^2 cancellation
            mean_ref[...] = mu
            invstd_ref[...] = jax.lax.rsqrt(var + BN_EPS)

    return pl.pallas_call(
        kernel,
        out_shape=(jax.ShapeDtypeStruct((1, c), jnp.float32),
                   jax.ShapeDtypeStruct((1, c), jnp.float32)),
        grid=(n,),
        in_specs=[pl.BlockSpec((1, m, c), lambda b: (b, 0, 0))],
        out_specs=(pl.BlockSpec((1, c), lambda b: (0, 0)),
                   pl.BlockSpec((1, c), lambda b: (0, 0))),
        compiler_params=pltpu.CompilerParams(dimension_semantics=("arbitrary",)),
    )(x_flat3)


# ----------------------------- fused CBN + LeakyReLU + 3x3 conv -----------------------------

def cbn_conv1(xs, y3, mean1, invstd1, w_taps, we_g, we_b):
    """Fused: CBN1(x) affine + LeakyReLU + 3x3 'same' conv (tap-decomposed matmuls),
    with per-channel sum / sum-of-squares of the conv output accumulated across the
    batch grid (finalized to mean2 / invstd2 on the last step)."""
    n, hh, ww, cin = xs.shape
    cpad = w_taps.shape[-1]
    ncond = y3.shape[1]
    wcv = ww + 16                       # canvas width: >=1 zero margin/side, 8-aligned
    m_canvas = (hh + 3) * wcv           # 1 top + 2 bottom zero margin rows
    ch = _row_chunk(hh)
    m_acc = ch * wcv
    denom = float(n * hh * ww)
    taps = [(ty, tx) for ty in range(3) for tx in range(3)]

    def kernel(y_ref, xs_ref, mean_ref, invstd_ref, w_ref, weg_ref, web_ref,
               h1_ref, sum_ref, sq_ref, canvas_ref, acc_ref):
        b = pl.program_id(0)

        @pl.when(b == 0)
        def _():
            sum_ref[...] = jnp.zeros_like(sum_ref)
            sq_ref[...] = jnp.zeros_like(sq_ref)

        canvas_ref[...] = jnp.zeros_like(canvas_ref)

        # conditional-BN affine for this batch element (embedding fused in)
        yb = y_ref[0]                                            # (ncond, 1)
        gamma = jnp.sum(yb * weg_ref[...], axis=0, keepdims=True)  # (1, cin)
        beta = jnp.sum(yb * web_ref[...], axis=0, keepdims=True)   # (1, cin)
        scale = (1.0 + gamma) * invstd_ref[...]
        shift = beta - mean_ref[...] * scale

        # stage normalized + activated rows into the zero-padded flat canvas
        for i in range(hh):
            v = xs_ref[0, i] * scale + shift                     # (ww, cin)
            v = jnp.where(v >= 0.0, v, LEAKY_SLOPE * v)
            canvas_ref[pl.ds((1 + i) * wcv + 8, ww), :] = v

        s_sum = jnp.zeros((1, cpad), jnp.float32)
        s_sq = jnp.zeros((1, cpad), jnp.float32)
        for rc in range(0, hh, ch):
            acc_ref[...] = jnp.zeros_like(acc_ref)
            for t, (ty, tx) in enumerate(taps):
                lhs = canvas_ref[pl.ds((rc + ty) * wcv + 7 + tx, m_acc), :]
                acc_ref[...] += jnp.dot(lhs, w_ref[t],
                                        preferred_element_type=jnp.float32)
            for r in range(ch):
                row = acc_ref[pl.ds(r * wcv, ww), :]             # (ww, cpad)
                h1_ref[0, rc + r] = row
                s_sum = s_sum + jnp.sum(row, axis=0, keepdims=True)
                s_sq = s_sq + jnp.sum(row * row, axis=0, keepdims=True)

        sum_ref[...] += s_sum
        sq_ref[...] += s_sq

        @pl.when(b == pl.num_programs(0) - 1)
        def _():
            mu = sum_ref[...] / denom
            var = sq_ref[...] / denom - mu * mu
            var = jnp.maximum(var, 0.0)
            sum_ref[...] = mu
            sq_ref[...] = jax.lax.rsqrt(var + BN_EPS)

    return pl.pallas_call(
        kernel,
        out_shape=(jax.ShapeDtypeStruct((n, hh, ww, cpad), jnp.float32),
                   jax.ShapeDtypeStruct((1, cpad), jnp.float32),
                   jax.ShapeDtypeStruct((1, cpad), jnp.float32)),
        grid=(n,),
        in_specs=[
            pl.BlockSpec((1, ncond, 1), lambda b: (b, 0, 0)),
            pl.BlockSpec((1, hh, ww, cin), lambda b: (b, 0, 0, 0)),
            pl.BlockSpec((1, cin), lambda b: (0, 0)),
            pl.BlockSpec((1, cin), lambda b: (0, 0)),
            pl.BlockSpec((9, cin, cpad), lambda b: (0, 0, 0)),
            pl.BlockSpec((ncond, cin), lambda b: (0, 0)),
            pl.BlockSpec((ncond, cin), lambda b: (0, 0)),
        ],
        out_specs=(
            pl.BlockSpec((1, hh, ww, cpad), lambda b: (b, 0, 0, 0)),
            pl.BlockSpec((1, cpad), lambda b: (0, 0)),
            pl.BlockSpec((1, cpad), lambda b: (0, 0)),
        ),
        scratch_shapes=[pltpu.VMEM((m_canvas, cin), jnp.float32),
                        pltpu.VMEM((m_acc, cpad), jnp.float32)],
        compiler_params=pltpu.CompilerParams(
            dimension_semantics=("arbitrary",),        # reduction (stats) over batch
            vmem_limit_bytes=32 * 1024 * 1024),
    )(y3, xs, mean1, invstd1, w_taps, we_g, we_b)


def cbn_conv2_residual(h1, xs, y3, mean2, invstd2, w_taps, wsc, we_g, we_b):
    """Fused: CBN2(h1) affine + LeakyReLU + 3x3 'same' conv + 1x1 shortcut conv
    (identity matrix when the shortcut is not learnable) + residual add."""
    n, hh, ww, cpad = h1.shape
    cin = xs.shape[-1]
    ncond = y3.shape[1]
    wcv = ww + 16
    m_canvas = (hh + 3) * wcv
    ch = _row_chunk(hh)
    m_acc = ch * wcv
    taps = [(ty, tx) for ty in range(3) for tx in range(3)]

    def kernel(y_ref, h1_ref, xs_ref, mean_ref, invstd_ref, w_ref, wsc_ref,
               weg_ref, web_ref, o_ref, canvas_ref, acc_ref):
        canvas_ref[...] = jnp.zeros_like(canvas_ref)

        yb = y_ref[0]                                            # (ncond, 1)
        gamma = jnp.sum(yb * weg_ref[...], axis=0, keepdims=True)  # (1, cpad)
        beta = jnp.sum(yb * web_ref[...], axis=0, keepdims=True)
        scale = (1.0 + gamma) * invstd_ref[...]
        shift = beta - mean_ref[...] * scale

        for i in range(hh):
            v = h1_ref[0, i] * scale + shift                     # (ww, cpad)
            v = jnp.where(v >= 0.0, v, LEAKY_SLOPE * v)
            canvas_ref[pl.ds((1 + i) * wcv + 8, ww), :] = v

        for rc in range(0, hh, ch):
            acc_ref[...] = jnp.zeros_like(acc_ref)
            for t, (ty, tx) in enumerate(taps):
                lhs = canvas_ref[pl.ds((rc + ty) * wcv + 7 + tx, m_acc), :]
                acc_ref[...] += jnp.dot(lhs, w_ref[t],
                                        preferred_element_type=jnp.float32)
            for r in range(ch):
                row = acc_ref[pl.ds(r * wcv, ww), :]             # (ww, cpad)
                sc = jnp.dot(xs_ref[0, rc + r], wsc_ref[...],
                             preferred_element_type=jnp.float32)  # shortcut, in VMEM
                o_ref[0, rc + r] = row + sc

    return pl.pallas_call(
        kernel,
        out_shape=jax.ShapeDtypeStruct((n, hh, ww, cpad), jnp.float32),
        grid=(n,),
        in_specs=[
            pl.BlockSpec((1, ncond, 1), lambda b: (b, 0, 0)),
            pl.BlockSpec((1, hh, ww, cpad), lambda b: (b, 0, 0, 0)),
            pl.BlockSpec((1, hh, ww, cin), lambda b: (b, 0, 0, 0)),
            pl.BlockSpec((1, cpad), lambda b: (0, 0)),
            pl.BlockSpec((1, cpad), lambda b: (0, 0)),
            pl.BlockSpec((9, cpad, cpad), lambda b: (0, 0, 0)),
            pl.BlockSpec((cin, cpad), lambda b: (0, 0)),
            pl.BlockSpec((ncond, cpad), lambda b: (0, 0)),
            pl.BlockSpec((ncond, cpad), lambda b: (0, 0)),
        ],
        out_specs=pl.BlockSpec((1, hh, ww, cpad), lambda b: (b, 0, 0, 0)),
        scratch_shapes=[pltpu.VMEM((m_canvas, cpad), jnp.float32),
                        pltpu.VMEM((m_acc, cpad), jnp.float32)],
        compiler_params=pltpu.CompilerParams(
            dimension_semantics=("parallel",),         # independent output tiles
            vmem_limit_bytes=32 * 1024 * 1024),
    )(y3, h1, xs, mean2, invstd2, w_taps, wsc, we_g, we_b)


# ----------------------------- glue (plain JAX) -----------------------------

def upsample2x(x):
    # TODO(synk): 2x nearest upsample kept as plain-JAX glue on the small input x;
    # fully fusing it needs an in-kernel column interleave (strided sublane store).
    return jnp.repeat(jnp.repeat(x, 2, axis=1), 2, axis=2)


def init_gblock_params(key, in_channels, out_channels, num_conditions, upsample):
    learnable_sc = (in_channels != out_channels) or upsample
    cpad = _round_up(out_channels, LANE)
    keys = jax.random.split(key, 5)
    ortho = jax.nn.initializers.orthogonal()

    def sn_conv_weight(k, co, ci, kh, kw):
        # orthogonal init on the (co, ci*kh*kw) flattening, divided by the exact
        # spectral norm (deterministic stand-in for torch's power-iteration sigma).
        w_flat = ortho(k, (co, ci * kh * kw), jnp.float32)
        sigma = jnp.linalg.norm(w_flat, ord=2)
        w_flat = w_flat / sigma
        w_oihw = w_flat.reshape(co, ci, kh, kw)
        return jnp.transpose(w_oihw, (2, 3, 1, 0))               # HWIO

    w1_hwio = sn_conv_weight(keys[0], out_channels, in_channels, 3, 3)
    w2_hwio = sn_conv_weight(keys[1], out_channels, out_channels, 3, 3)
    e1_hwio = sn_conv_weight(keys[2], 2 * in_channels, num_conditions, 1, 1)
    e2_hwio = sn_conv_weight(keys[3], 2 * out_channels, num_conditions, 1, 1)

    embed1_t = e1_hwio.reshape(num_conditions, 2 * in_channels)
    embed2_t = e2_hwio.reshape(num_conditions, 2 * out_channels)

    pad_o = cpad - out_channels
    params = {
        # reference-layout weights
        'w1_hwio': w1_hwio, 'w2_hwio': w2_hwio,
        'embed1_t': embed1_t, 'embed2_t': embed2_t,
        # lane-dense, tap-major kernel layouts (zero-padded once at init)
        'w1_taps': jnp.pad(w1_hwio.reshape(9, in_channels, out_channels),
                           ((0, 0), (0, 0), (0, pad_o))),
        'w2_taps': jnp.pad(w2_hwio.reshape(9, out_channels, out_channels),
                           ((0, 0), (0, pad_o), (0, pad_o))),
        'we1_gamma': embed1_t[:, :in_channels],
        'we1_beta': embed1_t[:, in_channels:],
        'we2_gamma': jnp.pad(embed2_t[:, :out_channels], ((0, 0), (0, pad_o))),
        'we2_beta': jnp.pad(embed2_t[:, out_channels:], ((0, 0), (0, pad_o))),
    }
    if learnable_sc:
        wsc_hwio = sn_conv_weight(keys[4], out_channels, in_channels, 1, 1)
        params['w_sc_hwio'] = wsc_hwio
        wsc_mat = wsc_hwio.reshape(in_channels, out_channels)
    else:
        wsc_mat = jnp.eye(in_channels, out_channels, dtype=jnp.float32)  # identity shortcut
    params['wsc_pad'] = jnp.pad(wsc_mat, ((0, 0), (0, pad_o)))
    return params


# ----------------------------- GBlock forward -----------------------------

def gblock_forward(x_nchw, y, params, upsample, in_channels, out_channels):
    x = jnp.transpose(x_nchw, (0, 2, 3, 1)).astype(jnp.float32)   # NCHW -> NHWC
    n, h, w, cin = x.shape
    cout = out_channels
    y3 = y.astype(jnp.float32).reshape(n, -1, 1)

    xs = upsample2x(x) if upsample else x                         # conv1 + shortcut input
    if xs.shape[2] % 8:
        raise NotImplementedError("spatial width must be a multiple of 8")
        # TODO(synk): general widths need masked-edge canvas stores.

    # CBN1 batch stats (identical over x and its nearest-upsampled copy)
    mean1, invstd1 = bn_stats(x.reshape(n, h * w, cin))

    # fused CBN1 + LReLU + conv1 (+ BN2 statistics accumulation)
    h1, mean2, invstd2 = cbn_conv1(xs, y3, mean1, invstd1,
                                   params['w1_taps'],
                                   params['we1_gamma'], params['we1_beta'])

    # fused CBN2 + LReLU + conv2 + shortcut + residual add
    out_pad = cbn_conv2_residual(h1, xs, y3, mean2, invstd2,
                                 params['w2_taps'], params['wsc_pad'],
                                 params['we2_gamma'], params['we2_beta'])

    out = out_pad[..., :cout]                                     # drop lane padding
    return jnp.transpose(out, (0, 3, 1, 2))                       # back to NCHW


# ----------------------------- pure-JAX reference -----------------------------

def ref_gblock_forward(x_nchw, y, p, upsample, in_channels, out_channels):
    learnable_sc = (in_channels != out_channels) or upsample
    x = jnp.transpose(x_nchw, (0, 2, 3, 1)).astype(jnp.float32)

    def bn(v):
        mean = v.mean(axis=(0, 1, 2), keepdims=True)
        var = v.var(axis=(0, 1, 2), keepdims=True)
        return (v - mean) * jax.lax.rsqrt(var + BN_EPS)

    def cbn(v, wt):
        e = y @ wt
        c = v.shape[-1]
        g = e[:, :c][:, None, None, :]
        b = e[:, c:][:, None, None, :]
        return (1.0 + g) * bn(v) + b

    def lrelu(v):
        return jnp.where(v >= 0, v, LEAKY_SLOPE * v)

    def conv(v, wgt, pad):
        return jax.lax.conv_general_dilated(
            v, wgt, (1, 1), pad, dimension_numbers=('NHWC', 'HWIO', 'NHWC'))

    def up(v):
        return jnp.repeat(jnp.repeat(v, 2, axis=1), 2, axis=2)

    hr = lrelu(cbn(x, p['embed1_t']))
    hr = conv(up(hr) if upsample else hr, p['w1_hwio'], 'SAME')
    hr = lrelu(cbn(hr, p['embed2_t']))
    hr = conv(hr, p['w2_hwio'], 'SAME')
    sc = x
    if learnable_sc:
        sc = conv(up(sc) if upsample else sc, p['w_sc_hwio'], 'VALID')
    out = sc + hr
    return jnp.transpose(out, (0, 3, 1, 2))


# ----------------------------- main -----------------------------

if __name__ == "__main__":
    key = jax.random.PRNGKey(0)
    k_x, k_y, k_p = jax.random.split(key, 3)

    N, CIN, COUT, H, W, NCOND = 2, 4, 8, 16, 16, 6
    UPSAMPLE = True
    # TODO(synk): spectral_norm's stochastic power-iteration sigma is replaced by the
    # exact spectral norm; BN uses training-mode batch statistics (fresh module state).

    x = jax.random.normal(k_x, (N, CIN, H, W), jnp.float32)   # NCHW like PyTorch
    y = jax.random.normal(k_y, (N, NCOND), jnp.float32)
    params = init_gblock_params(k_p, CIN, COUT, NCOND, UPSAMPLE)

    out = gblock_forward(x, y, params, UPSAMPLE, CIN, COUT)
    out = jax.block_until_ready(out)

    ref = ref_gblock_forward(x, y, params, UPSAMPLE, CIN, COUT)
    np.testing.assert_allclose(np.asarray(out), np.asarray(ref),
                               rtol=1e-3, atol=1e-3)
    print("KERNEL_OK")
</pallas_src>

<mosaic_0001>
module attributes {stable_mosaic.version = 11 : i64} {
  func.func @kernel(%arg0: i32, %arg1: memref<1x256x4xf32, #tpu.memory_space<vmem>>, %arg2: memref<1x4xf32, #tpu.memory_space<vmem>>, %arg3: memref<1x4xf32, #tpu.memory_space<vmem>>) attributes {dimension_semantics = [#tpu.dimension_semantics<arbitrary>], iteration_bounds = array<i64: 2>, scalar_prefetch = 0 : i64, scratch_operands = 0 : i64, tpu.core_type = #tpu.core_type<tc>, window_params = [{transform_indices = @transform_0, window_bounds = array<i64: 1, 256, 4>}, {pipeline_mode = #tpu.pipeline_mode<synchronous>, transform_indices = @transform_1, window_bounds = array<i64: 1, 4>}, {pipeline_mode = #tpu.pipeline_mode<synchronous>, transform_indices = @transform_2, window_bounds = array<i64: 1, 4>}]} {
    %c0_i32 = arith.constant 0 : i32
    %0 = arith.cmpi eq, %arg0, %c0_i32 : i32
    %1 = arith.extui %0 : i1 to i32
    %c0_i32_0 = arith.constant 0 : i32
    %2 = arith.cmpi ne, %1, %c0_i32_0 : i32
    scf.if %2 {
      %cst_13 = arith.constant 0.000000e+00 : f32
      %19 = vector.broadcast %cst_13 : f32 to vector<1x4xf32>
      %c0_14 = arith.constant 0 : index
      %c0_15 = arith.constant 0 : index
      %20 = vector.load %arg2[%c0_14, %c0_15] : memref<1x4xf32, #tpu.memory_space<vmem>>, vector<1x4xf32>
      tpu.vector_store %arg2[%c0_14, %c0_15], %19 {strides = array<i32>} : memref<1x4xf32, #tpu.memory_space<vmem>>, vector<1x4xf32>,
      %cst_16 = arith.constant 0.000000e+00 : f32
      %21 = vector.broadcast %cst_16 : f32 to vector<1x4xf32>
      %c0_17 = arith.constant 0 : index
      %c0_18 = arith.constant 0 : index
      %22 = vector.load %arg3[%c0_17, %c0_18] : memref<1x4xf32, #tpu.memory_space<vmem>>, vector<1x4xf32>
      tpu.vector_store %arg3[%c0_17, %c0_18], %21 {strides = array<i32>} : memref<1x4xf32, #tpu.memory_space<vmem>>, vector<1x4xf32>,
    } else {
    }
    %c0 = arith.constant 0 : index
    %c0_1 = arith.constant 0 : index
    %c0_2 = arith.constant 0 : index
    %3 = vector.load %arg1[%c0, %c0_1, %c0_2] : memref<1x256x4xf32, #tpu.memory_space<vmem>>, vector<1x256x4xf32>
    %4 = vector.shape_cast %3 : vector<1x256x4xf32> to vector<256x4xf32>
    %c0_3 = arith.constant 0 : index
    %c0_4 = arith.constant 0 : index
    %5 = vector.load %arg2[%c0_3, %c0_4] : memref<1x4xf32, #tpu.memory_space<vmem>>, vector<1x4xf32>
    %cst = arith.constant dense<0.000000e+00> : vector<4xf32>
    %6 = vector.multi_reduction <add>, %4, %cst [0] : vector<256x4xf32> to vector<4xf32>
    %7 = vector.shape_cast %6 : vector<4xf32> to vector<1x4xf32>
    %8 = arith.addf %5, %7 : vector<1x4xf32>
    %c0_5 = arith.constant 0 : index
    %c0_6 = arith.constant 0 : index
    %9 = vector.load %arg2[%c0_5, %c0_6] : memref<1x4xf32, #tpu.memory_space<vmem>>, vector<1x4xf32>
    tpu.vector_store %arg2[%c0_5, %c0_6], %8 {strides = array<i32>} : memref<1x4xf32, #tpu.memory_space<vmem>>, vector<1x4xf32>,
    %c0_7 = arith.constant 0 : index
    %c0_8 = arith.constant 0 : index
    %10 = vector.load %arg3[%c0_7, %c0_8] : memref<1x4xf32, #tpu.memory_space<vmem>>, vector<1x4xf32>
    %11 = arith.mulf %4, %4 : vector<256x4xf32>
    %cst_9 = arith.constant dense<0.000000e+00> : vector<4xf32>
    %12 = vector.multi_reduction <add>, %11, %cst_9 [0] : vector<256x4xf32> to vector<4xf32>
    %13 = vector.shape_cast %12 : vector<4xf32> to vector<1x4xf32>
    %14 = arith.addf %10, %13 : vector<1x4xf32>
    %c0_10 = arith.constant 0 : index
    %c0_11 = arith.constant 0 : index
    %15 = vector.load %arg3[%c0_10, %c0_11] : memref<1x4xf32, #tpu.memory_space<vmem>>, vector<1x4xf32>
    tpu.vector_store %arg3[%c0_10, %c0_11], %14 {strides = array<i32>} : memref<1x4xf32, #tpu.memory_space<vmem>>, vector<1x4xf32>,
    %c1_i32 = arith.constant 1 : i32
    %16 = arith.cmpi eq, %arg0, %c1_i32 : i32
    %17 = arith.extui %16 : i1 to i32
    %c0_i32_12 = arith.constant 0 : i32
    %18 = arith.cmpi ne, %17, %c0_i32_12 : i32
    scf.if %18 {
      %c0_13 = arith.constant 0 : index
      %c0_14 = arith.constant 0 : index
      %19 = vector.load %arg2[%c0_13, %c0_14] : memref<1x4xf32, #tpu.memory_space<vmem>>, vector<1x4xf32>
      %cst_15 = arith.constant 5.120000e+02 : f32
      %20 = vector.broadcast %cst_15 : f32 to vector<1x4xf32>
      %21 = arith.divf %19, %20 : vector<1x4xf32>
      %c0_16 = arith.constant 0 : index
      %c0_17 = arith.constant 0 : index
      %22 = vector.load %arg3[%c0_16, %c0_17] : memref<1x4xf32, #tpu.memory_space<vmem>>, vector<1x4xf32>
      %cst_18 = arith.constant 5.120000e+02 : f32
      %23 = vector.broadcast %cst_18 : f32 to vector<1x4xf32>
      %24 = arith.divf %22, %23 : vector<1x4xf32>
      %25 = arith.mulf %21, %21 : vector<1x4xf32>
      %26 = arith.subf %24, %25 : vector<1x4xf32>
      %cst_19 = arith.constant 0.000000e+00 : f32
      %27 = vector.broadcast %cst_19 : f32 to vector<1x4xf32>
      %28 = arith.maximumf %26, %27 : vector<1x4xf32>
      %c0_20 = arith.constant 0 : index
      %c0_21 = arith.constant 0 : index
      %29 = vector.load %arg2[%c0_20, %c0_21] : memref<1x4xf32, #tpu.memory_space<vmem>>, vector<1x4xf32>
      tpu.vector_store %arg2[%c0_20, %c0_21], %21 {strides = array<i32>} : memref<1x4xf32, #tpu.memory_space<vmem>>, vector<1x4xf32>,
      %cst_22 = arith.constant 9.99999974E-6 : f32
      %30 = vector.broadcast %cst_22 : f32 to vector<1x4xf32>
      %31 = arith.addf %28, %30 : vector<1x4xf32>
      %32 = math.rsqrt %31 : vector<1x4xf32>
      %c0_23 = arith.constant 0 : index
      %c0_24 = arith.constant 0 : index
      %33 = vector.load %arg3[%c0_23, %c0_24] : memref<1x4xf32, #tpu.memory_space<vmem>>, vector<1x4xf32>
      tpu.vector_store %arg3[%c0_23, %c0_24], %32 {strides = array<i32>} : memref<1x4xf32, #tpu.memory_space<vmem>>, vector<1x4xf32>,
    } else {
    }
    return
  }
  func.func @transform_0(%arg0: i32) -> (i32, i32, i32) {
    %c0_i32 = arith.constant 0 : i32
    %c0_i32_0 = arith.constant 0 : i32
    %c0_i32_1 = arith.constant 0 : i32
    return %arg0, %c0_i32, %c0_i32_0 : i32, i32, i32
  }
  func.func @transform_1(%arg0: i32) -> (i32, i32) {
    %c0_i32 = arith.constant 0 : i32
    %c0_i32_0 = arith.constant 0 : i32
    %c0_i32_1 = arith.constant 0 : i32
    return %c0_i32, %c0_i32_0 : i32, i32
  }
  func.func @transform_2(%arg0: i32) -> (i32, i32) {
    %c0_i32 = arith.constant 0 : i32
    %c0_i32_0 = arith.constant 0 : i32
    %c0_i32_1 = arith.constant 0 : i32
    return %c0_i32, %c0_i32_0 : i32, i32
  }
}

</mosaic_0001>

<llo_original>
// kernel: tpu_custom_call.1
$region0: #{tpu_custom_call.1}
  #allocation0 [shape = 'u32[]', space=smem, size = 0x4, offset = 0x4, fixed_abs, tag = 'smem constant byte address 0x4 - core index']
  #allocation1 [shape = 'u32[72,128]{1,0:T(1,128)}', space=vmem, size = 0x9000, scoped, tag = 'internal scratch']
  %s0 = inlined_call_operand.vmem [shape: f32[2,256,4], index: 0, kind: input, shape index: {}]
  %s1 = inlined_call_operand.hbm [shape: f32[1,4], index: 1, kind: output, shape index: {0}]
  %s2 = inlined_call_operand.hbm [shape: f32[1,4], index: 2, kind: output, shape index: {1}]
  %3 = xla_tuple %s1, %s2
  %s4 = sld [smem:[#allocation0]]
  $region53: #{tpu_custom_call.1} parent=0
    _
  %s6 = ssub.s32 1, %s4
  %s7 = scalar_select 0, %s6, %s4
  $region1: #{tpu_custom_call.1} parent=0
    #allocation2 [shape = 'u8[512]{0}', space=vmem, size = 0x400, scoped, tag = 'output window, operand 0, single buffered']
    #allocation3 [shape = 's32[2]{0}', space=sflag, size = 0x8, scoped, tag = 'scoped memory for tpu_custom_call.1']
    #allocation4 [shape = 'u8[512]{0}', space=vmem, size = 0x400, scoped, tag = 'output window, operand 1, single buffered']
    #allocation5 [shape = 's32[1]{0}', space=sflag, size = 0x4, scoped, tag = 'scoped memory for tpu_custom_call.1']
    %8 = vsyncpa [#allocation3], 0
    %9 = vsyncpa [#allocation5], 0
    loop: start=0, step=1, limit=4
    $region2: #{tpu_custom_call.1} parent=1 // loop_pre_header
      _
    $region3: #{tpu_custom_call.1} parent=1 // loop_header
      %s11 = sphi 0, %s15
      %p12 = scmp.ge.s32.totalorder %s11, 4
      %s21 = sphi 0, %s23
      %s24 = sphi 0, %s21
      %s25 = sphi 0, %s24
      %s41 = sphi 0, %s25
      %s45 = sphi 0, %s45
      %s47 = sphi 0, %s45
      %s48 = sphi 0, %s47
      %s62 = sphi 0, %s48
      %s66 = sphi 0, %s66
      %s68 = sphi 0, %s66
      %s69 = sphi 0, %s68
      %s83 = sphi 0, %s69
    $region4: #{tpu_custom_call.1} parent=1 // loop_header_branch
      %14 = sbr.rel (%p12) target = $region8
    $region5: #{tpu_custom_call.1} parent=1 // loop_body
      %s16 = ssub.s32 %s11, 1
      %s17 = ssub.s32 %s11, 2
      %s18 = sadd.s32 %s11, 1
      %s19 = ssub.s32 %s11, %s18
      %p20 = scmp.eq.s32.totalorder %s19, 0
      %s22 = sadd.s32 %s21, 1
      %s23 = scalar_select %p20, %s21, %s22
      %p26 = pneg %p20
      %p27 = scmp.eq.s32.totalorder %s11, 1
      %p28 = por %p26, %p27
      %p29 = scmp.ne.s32.totalorder %s21, %s24
      %p30 = scmp.eq.s32.totalorder %s11, 0
      %p31 = por %p29, %p30
      %p32 = scmp.ne.s32.totalorder %s21, %s24
      %p33 = scmp.eq.s32.totalorder %s16, 1
      %p34 = por %p32, %p33
      %p35 = scmp.ne.s32.totalorder %s24, %s25
      %p36 = scmp.eq.s32.totalorder %s16, 0
      %p37 = por %p35, %p36
      %p38 = scmp.ne.s32.totalorder %s24, %s25
      %p39 = scmp.eq.s32.totalorder %s17, 1
      %p40 = por %p38, %p39
      %p42 = scmp.ne.s32.totalorder %s25, %s41
      %p43 = scmp.eq.s32.totalorder %s17, 0
      %p44 = por %p42, %p43
      %s46 = sadd.s32 %s45, 1
      %p49 = scmp.eq.s32.totalorder %s11, 1
      %p50 = scmp.ne.s32.totalorder %s45, %s47
      %p51 = scmp.eq.s32.totalorder %s11, 0
      %p52 = por %p50, %p51
      %p53 = scmp.ne.s32.totalorder %s45, %s47
      %p54 = scmp.eq.s32.totalorder %s16, 1
      %p55 = por %p53, %p54
      %p56 = scmp.ne.s32.totalorder %s47, %s48
      %p57 = scmp.eq.s32.totalorder %s16, 0
      %p58 = por %p56, %p57
      %p59 = scmp.ne.s32.totalorder %s47, %s48
      %p60 = scmp.eq.s32.totalorder %s17, 1
      %p61 = por %p59, %p60
      %p63 = scmp.ne.s32.totalorder %s48, %s62
      %p64 = scmp.eq.s32.totalorder %s17, 0
      %p65 = por %p63, %p64
      %s67 = sadd.s32 %s66, 1
      %p70 = scmp.eq.s32.totalorder %s11, 1
      %p71 = scmp.ne.s32.totalorder %s66, %s68
      %p72 = scmp.eq.s32.totalorder %s11, 0
      %p73 = por %p71, %p72
      %p74 = scmp.ne.s32.totalorder %s66, %s68
      %p75 = scmp.eq.s32.totalorder %s16, 1
      %p76 = por %p74, %p75
      %p77 = scmp.ne.s32.totalorder %s68, %s69
      %p78 = scmp.eq.s32.totalorder %s16, 0
      %p79 = por %p77, %p78
      %p80 = scmp.ne.s32.totalorder %s68, %s69
      %p81 = scmp.eq.s32.totalorder %s17, 1
      %p82 = por %p80, %p81
      %p84 = scmp.ne.s32.totalorder %s69, %s83
      %p85 = scmp.eq.s32.totalorder %s17, 0
      %p86 = por %p84, %p85
      %p87 = scmp.le.s32.totalorder 1, %s11
      %p88 = scmp.lt.s32.totalorder %s11, 3
      %p89 = pnand %p87, %p88
      %p90 = pneg %p89
      // Predicated region
      $region9: #{tpu_custom_call.1} parent=5 // pred_check
        _
      $region10: #{tpu_custom_call.1} parent=5 // pred_check_branch
        %92 = sbr.rel (%p89) target = $region12
      $region11: #{tpu_custom_call.1} parent=5 // pred_region
        %s93 = ssub.s32 %s11, 1
      $region12: #{tpu_custom_call.1} parent=5 // pred_fallthru
        _
      %p94 = scmp.lt.s32.totalorder %s11, 2
      // Predicated region
      $region13: #{tpu_custom_call.1} parent=5 // pred_check
        %p95 = pneg %p94
      $region14: #{tpu_custom_call.1} parent=5 // pred_check_branch
        %97 = sbr.rel (%p95) target = $region16
      $region15: #{tpu_custom_call.1} parent=5 // pred_region
        // Predicated region
        $region17: #{tpu_custom_call.1} parent=15 // pred_check
          %p98 = pneg %p31
        $region18: #{tpu_custom_call.1} parent=15 // pred_check_branch
          %100 = sbr.rel (%p98) target = $region20
        $region19: #{tpu_custom_call.1} parent=15 // pred_region
          %p101 = scmp.lt.s32.totalorder %s11, 1
          %s102 = scalar_select %p101, %s11, 1
          %s103 = smul.addr %s102, 32
          %s104 = smul.addr %s103, 8
          %s105 = scalar_lea.vmem %s0, %s104
        $region20: #{tpu_custom_call.1} parent=15 // pred_fallthru
          _
      $region16: #{tpu_custom_call.1} parent=5 // pred_fallthru
        _
      %p106 = scmp.le.s32.totalorder 1, %s11
      %p107 = scmp.lt.s32.totalorder %s11, 3
      %p108 = pnand %p106, %p107
      %p109 = pneg %p108
      // Predicated region
      $region21: #{tpu_custom_call.1} parent=5 // pred_check
        _
      $region22: #{tpu_custom_call.1} parent=5 // pred_check_branch
        %111 = sbr.rel (%p108) target = $region24
      $region23: #{tpu_custom_call.1} parent=5 // pred_region
        %s112 = ssub.s32 %s11, 1
        %p113 = scmp.lt.s32.totalorder %s16, 1
        %s114 = scalar_select %p113, %s16, 1
        %s115 = smul.addr %s114, 32
        %s116 = smul.addr %s115, 8
        %s117 = scalar_lea.vmem %s0, %s116
        %p118 = pneg %p37
        %p119 = pneg %p34
        %p120 = pneg %p58
        %p121 = pneg %p55
        %p122 = pneg %p79
        %p123 = pneg %p76
        %p124 = scmp.lt.s32.totalorder %s16, 1
        %s125 = scalar_select %p124, %s16, 1
        %s126 = smul.addr %s125, 32
        %s127 = smul.addr %s126, 8
        %s128 = scalar_lea.vmem %s0, %s127
        %p129 = scmp.eq.s32.totalorder %s16, 0
        // Predicated region
        $region25: #{tpu_custom_call.1} parent=23 // pred_check
          %p130 = pneg %p129
        $region26: #{tpu_custom_call.1} parent=23 // pred_check_branch
          %132 = sbr.rel (%p130) target = $region28
        $region27: #{tpu_custom_call.1} parent=23 // pred_region
          %vm133 = vcmask 24576
          %134 = vst.msk [vmem:[#allocation2] sm:$0x1] %vm133, 0.0
          %135 = vst.msk [vmem:[#allocation4] sm:$0x1] %vm133, 0.0
        $region28: #{tpu_custom_call.1} parent=23 // pred_fallthru
          _
        %v136 = vld [vmem:[%s128] sm:$0xff]
        %v137 = vld [vmem:[%s128 + $0x8] sm:$0xff]
        %v138 = vld [vmem:[%s128 + $0x10] sm:$0xff]
        %v139 = vld [vmem:[%s128 + $0x18] sm:$0xff]
        %v140 = vld [vmem:[%s128 + $0x20] sm:$0xff]
        %v141 = vld [vmem:[%s128 + $0x28] sm:$0xff]
        %v142 = vld [vmem:[%s128 + $0x30] sm:$0xff]
        %v143 = vld [vmem:[%s128 + $0x38] sm:$0xff]
        %v144 = vld [vmem:[%s128 + $0x40] sm:$0xff]
        %v145 = vld [vmem:[%s128 + $0x48] sm:$0xff]
        %v146 = vld [vmem:[%s128 + $0x50] sm:$0xff]
        %v147 = vld [vmem:[%s128 + $0x58] sm:$0xff]
        %v148 = vld [vmem:[%s128 + $0x60] sm:$0xff]
        %v149 = vld [vmem:[%s128 + $0x68] sm:$0xff]
        %v150 = vld [vmem:[%s128 + $0x70] sm:$0xff]
        %v151 = vld [vmem:[%s128 + $0x78] sm:$0xff]
        %v152 = vld [vmem:[%s128 + $0x80] sm:$0xff]
        %v153 = vld [vmem:[%s128 + $0x88] sm:$0xff]
        %v154 = vld [vmem:[%s128 + $0x90] sm:$0xff]
        %v155 = vld [vmem:[%s128 + $0x98] sm:$0xff]
        %v156 = vld [vmem:[%s128 + $0xa0] sm:$0xff]
        %v157 = vld [vmem:[%s128 + $0xa8] sm:$0xff]
        %v158 = vld [vmem:[%s128 + $0xb0] sm:$0xff]
        %v159 = vld [vmem:[%s128 + $0xb8] sm:$0xff]
        %v160 = vld [vmem:[%s128 + $0xc0] sm:$0xff]
        %v161 = vld [vmem:[%s128 + $0xc8] sm:$0xff]
        %v162 = vld [vmem:[%s128 + $0xd0] sm:$0xff]
        %v163 = vld [vmem:[%s128 + $0xd8] sm:$0xff]
        %v164 = vld [vmem:[%s128 + $0xe0] sm:$0xff]
        %v165 = vld [vmem:[%s128 + $0xe8] sm:$0xff]
        %v166 = vld [vmem:[%s128 + $0xf0] sm:$0xff]
        %v167 = vld [vmem:[%s128 + $0xf8] sm:$0xff]
        %v168 = vld [vmem:[#allocation2] sm:$0x1]
        %vm169 = vcmask 31744
        %v170 = vsel %vm169, %v136, 0.0
        %v171 = vsel %vm169, %v137, 0.0
        %v172 = vadd.f32 %v170, %v171
        %v173 = vsel %vm169, %v138, 0.0
        %v174 = vadd.f32 %v172, %v173
        %v175 = vsel %vm169, %v139, 0.0
        %v176 = vadd.f32 %v174, %v175
        %v177 = vsel %vm169, %v140, 0.0
        %v178 = vadd.f32 %v176, %v177
        %v179 = vsel %vm169, %v141, 0.0
        %v180 = vadd.f32 %v178, %v179
        %v181 = vsel %vm169, %v142, 0.0
        %v182 = vadd.f32 %v180, %v181
        %v183 = vsel %vm169, %v143, 0.0
        %v184 = vadd.f32 %v182, %v183
        %v185 = vsel %vm169, %v144, 0.0
        %v186 = vadd.f32 %v184, %v185
        %v187 = vsel %vm169, %v145, 0.0
        %v188 = vadd.f32 %v186, %v187
        %v189 = vsel %vm169, %v146, 0.0
        %v190 = vadd.f32 %v188, %v189
        %v191 = vsel %vm169, %v147, 0.0
        %v192 = vadd.f32 %v190, %v191
        %v193 = vsel %vm169, %v148, 0.0
        %v194 = vadd.f32 %v192, %v193
        %v195 = vsel %vm169, %v149, 0.0
        %v196 = vadd.f32 %v194, %v195
        %v197 = vsel %vm169, %v150, 0.0
        %v198 = vadd.f32 %v196, %v197
        %v199 = vsel %vm169, %v151, 0.0
        %v200 = vadd.f32 %v198, %v199
        %v201 = vsel %vm169, %v152, 0.0
        %v202 = vadd.f32 %v200, %v201
        %v203 = vsel %vm169, %v153, 0.0
        %v204 = vadd.f32 %v202, %v203
        %v205 = vsel %vm169, %v154, 0.0
        %v206 = vadd.f32 %v204, %v205
        %v207 = vsel %vm169, %v155, 0.0
        %v208 = vadd.f32 %v206, %v207
        %v209 = vsel %vm169, %v156, 0.0
        %v210 = vadd.f32 %v208, %v209
        %v211 = vsel %vm169, %v157, 0.0
        %v212 = vadd.f32 %v210, %v211
        %v213 = vsel %vm169, %v158, 0.0
        %v214 = vadd.f32 %v212, %v213
        %v215 = vsel %vm169, %v159, 0.0
        %v216 = vadd.f32 %v214, %v215
        %v217 = vsel %vm169, %v160, 0.0
        %v218 = vadd.f32 %v216, %v217
        %v219 = vsel %vm169, %v161, 0.0
        %v220 = vadd.f32 %v218, %v219
        %v221 = vsel %vm169, %v162, 0.0
        %v222 = vadd.f32 %v220, %v221
        %v223 = vsel %vm169, %v163, 0.0
        %v224 = vadd.f32 %v222, %v223
        %v225 = vsel %vm169, %v164, 0.0
        %v226 = vadd.f32 %v224, %v225
        %v227 = vsel %vm169, %v165, 0.0
        %v228 = vadd.f32 %v226, %v227
        %v229 = vsel %vm169, %v166, 0.0
        %v230 = vadd.f32 %v228, %v229
        %v231 = vsel %vm169, %v167, 0.0
        %v232 = vadd.f32 %v230, %v231
        %v233 = vrot.slane %v232, 4
        %v234 = vadd.f32 %v232, %v233
        %v235 = vrot.slane %v234, 2
        %v236 = vadd.f32 %v234, %v235
        %v237 = vrot.slane %v236, 1
        %v238 = vadd.f32 %v236, %v237
        %v239 = vadd.f32 %v168, %v238
        %vm240 = vcmask 24576
        %241 = vst.msk [vmem:[#allocation2] sm:$0x1] %vm240, %v239
        %v242 = vld [vmem:[#allocation4] sm:$0x1]
        %v243 = vmul.f32 %v136, %v136
        %v244 = vmul.f32 %v137, %v137
        %v245 = vmul.f32 %v138, %v138
        %v246 = vmul.f32 %v139, %v139
        %v247 = vmul.f32 %v140, %v140
        %v248 = vmul.f32 %v141, %v141
        %v249 = vmul.f32 %v142, %v142
        %v250 = vmul.f32 %v143, %v143
        %v251 = vmul.f32 %v144, %v144
        %v252 = vmul.f32 %v145, %v145
        %v253 = vmul.f32 %v146, %v146
        %v254 = vmul.f32 %v147, %v147
        %v255 = vmul.f32 %v148, %v148
        %v256 = vmul.f32 %v149, %v149
        %v257 = vmul.f32 %v150, %v150
        %v258 = vmul.f32 %v151, %v151
        %v259 = vmul.f32 %v152, %v152
        %v260 = vmul.f32 %v153, %v153
        %v261 = vmul.f32 %v154, %v154
        %v262 = vmul.f32 %v155, %v155
        %v263 = vmul.f32 %v156, %v156
        %v264 = vmul.f32 %v157, %v157
        %v265 = vmul.f32 %v158, %v158
        %v266 = vmul.f32 %v159, %v159
        %v267 = vmul.f32 %v160, %v160
        %v268 = vmul.f32 %v161, %v161
        %v269 = vmul.f32 %v162, %v162
        %v270 = vmul.f32 %v163, %v163
        %v271 = vmul.f32 %v164, %v164
        %v272 = vmul.f32 %v165, %v165
        %v273 = vmul.f32 %v166, %v166
        %v274 = vmul.f32 %v167, %v167
        %v275 = vsel %vm169, %v243, 0.0
        %v276 = vsel %vm169, %v244, 0.0
        %v277 = vadd.f32 %v275, %v276
        %v278 = vsel %vm169, %v245, 0.0
        %v279 = vadd.f32 %v277, %v278
        %v280 = vsel %vm169, %v246, 0.0
        %v281 = vadd.f32 %v279, %v280
        %v282 = vsel %vm169, %v247, 0.0
        %v283 = vadd.f32 %v281, %v282
        %v284 = vsel %vm169, %v248, 0.0
        %v285 = vadd.f32 %v283, %v284
        %v286 = vsel %vm169, %v249, 0.0
        %v287 = vadd.f32 %v285, %v286
        %v288 = vsel %vm169, %v250, 0.0
        %v289 = vadd.f32 %v287, %v288
        %v290 = vsel %vm169, %v251, 0.0
        %v291 = vadd.f32 %v289, %v290
        %v292 = vsel %vm169, %v252, 0.0
        %v293 = vadd.f32 %v291, %v292
        %v294 = vsel %vm169, %v253, 0.0
        %v295 = vadd.f32 %v293, %v294
        %v296 = vsel %vm169, %v254, 0.0
        %v297 = vadd.f32 %v295, %v296
        %v298 = vsel %vm169, %v255, 0.0
        %v299 = vadd.f32 %v297, %v298
        %v300 = vsel %vm169, %v256, 0.0
        %v301 = vadd.f32 %v299, %v300
        %v302 = vsel %vm169, %v257, 0.0
        %v303 = vadd.f32 %v301, %v302
        %v304 = vsel %vm169, %v258, 0.0
        %v305 = vadd.f32 %v303, %v304
        %v306 = vsel %vm169, %v259, 0.0
        %v307 = vadd.f32 %v305, %v306
        %v308 = vsel %vm169, %v260, 0.0
        %v309 = vadd.f32 %v307, %v308
        %v310 = vsel %vm169, %v261, 0.0
        %v311 = vadd.f32 %v309, %v310
        %v312 = vsel %vm169, %v262, 0.0
        %v313 = vadd.f32 %v311, %v312
        %v314 = vsel %vm169, %v263, 0.0
        %v315 = vadd.f32 %v313, %v314
        %v316 = vsel %vm169, %v264, 0.0
        %v317 = vadd.f32 %v315, %v316
        %v318 = vsel %vm169, %v265, 0.0
        %v319 = vadd.f32 %v317, %v318
        %v320 = vsel %vm169, %v266, 0.0
        %v321 = vadd.f32 %v319, %v320
        %v322 = vsel %vm169, %v267, 0.0
        %v323 = vadd.f32 %v321, %v322
        %v324 = vsel %vm169, %v268, 0.0
        %v325 = vadd.f32 %v323, %v324
        %v326 = vsel %vm169, %v269, 0.0
        %v327 = vadd.f32 %v325, %v326
        %v328 = vsel %vm169, %v270, 0.0
        %v329 = vadd.f32 %v327, %v328
        %v330 = vsel %vm169, %v271, 0.0
        %v331 = vadd.f32 %v329, %v330
        %v332 = vsel %vm169, %v272, 0.0
        %v333 = vadd.f32 %v331, %v332
        %v334 = vsel %vm169, %v273, 0.0
        %v335 = vadd.f32 %v333, %v334
        %v336 = vsel %vm169, %v274, 0.0
        %v337 = vadd.f32 %v335, %v336
        %v338 = vrot.slane %v337, 4
        %v339 = vadd.f32 %v337, %v338
        %v340 = vrot.slane %v339, 2
        %v341 = vadd.f32 %v339, %v340
        %v342 = vrot.slane %v341, 1
        %v343 = vadd.f32 %v341, %v342
        %v344 = vadd.f32 %v242, %v343
        %345 = vst.msk [vmem:[#allocation4] sm:$0x1] %vm240, %v344
        %p346 = scmp.eq.s32.totalorder %s16, 1
        // Predicated region
        $region29: #{tpu_custom_call.1} parent=23 // pred_check
          %p347 = pneg %p346
        $region30: #{tpu_custom_call.1} parent=23 // pred_check_branch
          %349 = sbr.rel (%p347) target = $region32
        $region31: #{tpu_custom_call.1} parent=23 // pred_region
          %v350 = vld [vmem:[#allocation2] sm:$0x1]
          %v351 = vrcp.pop 512.0
          %v352 = vmul.f32 512.0, %v351
          %v353 = vsub.f32 1.0, %v352
          %v354 = vmul.f32 %v351, %v353
          %v355 = vadd.f32 %v351, %v354
          %vm356 = vweird.f32 %v351
          %v357 = vsel %vm356, %v351, %v355
          %v358 = vmul.f32 %v350, %v357
          %v359 = vld [vmem:[#allocation4] sm:$0x1]
          %v360 = vmul.f32 %v359, %v357
          %v361 = vmul.f32 %v358, %v358
          %v362 = vsub.f32 %v360, %v361
          %v363 = vmax.f32 %v362, 0.0
          %364 = vst.msk [vmem:[#allocation2] sm:$0x1] %vm240, %v358
          %v365 = vadd.f32 %v363, 1e-05
          %v366 = vrsqrt.pop %v365
          %v367 = vmul.f32 %v366, %v365
          %v368 = vmul.f32 %v367, %v366
          %v369 = vmul.f32 0.5, %v368
          %v370 = vsub.f32 1.5, %v369
          %v371 = vmul.f32 %v366, %v370
          %vm372 = vweird.f32 %v365
          %vm373 = vweird.f32 %v366
          %vm374 = vmor %vm372, %vm373
          %v375 = vsel %vm374, %v366, %v371
          %376 = vst.msk [vmem:[#allocation4] sm:$0x1] %vm240, %v375
        $region32: #{tpu_custom_call.1} parent=23 // pred_fallthru
          _
        // Predicated region
        $region33: #{tpu_custom_call.1} parent=23 // pred_check
          %p377 = pneg %p55
        $region34: #{tpu_custom_call.1} parent=23 // pred_check_branch
          %379 = sbr.rel (%p377) target = $region36
        $region35: #{tpu_custom_call.1} parent=23 // pred_region
          %381 = vsyncadd [#allocation3], 0
          %s383 = sshll.u32 [#allocation2], 4
          %s384 = int_to_ptr.vmem [resolvable:$true] %s383
          %s385 = sshll.u32 %s1, 4
          %s386 = int_to_ptr.hbm [resolvable:$true] %s385
          %388 = dma.vmem_to_hbm [thread:$0]  %s384, 16, %s386, [#allocation3]
        $region36: #{tpu_custom_call.1} parent=23 // pred_fallthru
          _
        // Predicated region
        $region37: #{tpu_custom_call.1} parent=23 // pred_check
          %p389 = pneg %p76
        $region38: #{tpu_custom_call.1} parent=23 // pred_check_branch
          %391 = sbr.rel (%p389) target = $region40
        $region39: #{tpu_custom_call.1} parent=23 // pred_region
          %393 = vsyncadd [#allocation5], 0
          %s395 = sshll.u32 [#allocation4], 4
          %s396 = int_to_ptr.vmem [resolvable:$true] %s395
          %s397 = sshll.u32 %s2, 4
          %s398 = int_to_ptr.hbm [resolvable:$true] %s397
          %400 = dma.vmem_to_hbm [thread:$0]  %s396, 16, %s398, [#allocation5]
        $region40: #{tpu_custom_call.1} parent=23 // pred_fallthru
          _
        // Predicated region
        $region41: #{tpu_custom_call.1} parent=23 // pred_check
          %p401 = pneg %p55
        $region42: #{tpu_custom_call.1} parent=23 // pred_check_branch
          %403 = sbr.rel (%p401) target = $region44
        $region43: #{tpu_custom_call.1} parent=23 // pred_region
          %405 = dma.done [#allocation3], 16
        $region44: #{tpu_custom_call.1} parent=23 // pred_fallthru
          _
        // Predicated region
        $region45: #{tpu_custom_call.1} parent=23 // pred_check
          %p406 = pneg %p76
        $region46: #{tpu_custom_call.1} parent=23 // pred_check_branch
          %408 = sbr.rel (%p406) target = $region48
        $region47: #{tpu_custom_call.1} parent=23 // pred_region
          %410 = dma.done [#allocation5], 16
        $region48: #{tpu_custom_call.1} parent=23 // pred_fallthru
          _
      $region24: #{tpu_custom_call.1} parent=5 // pred_fallthru
        _
      %p411 = scmp.le.s32.totalorder 2, %s11
      // Predicated region
      $region49: #{tpu_custom_call.1} parent=5 // pred_check
        %p412 = pneg %p411
      $region50: #{tpu_custom_call.1} parent=5 // pred_check_branch
        %414 = sbr.rel (%p412) target = $region52
      $region51: #{tpu_custom_call.1} parent=5 // pred_region
        %s415 = ssub.s32 %s11, 2
      $region52: #{tpu_custom_call.1} parent=5 // pred_fallthru
        _
    $region6: #{tpu_custom_call.1} parent=1 // loop_footer
      %s15 = sadd.s32 1, %s11
    $region7: #{tpu_custom_call.1} parent=1 // loop_footer_branch
      %10 = sbr.rel target = $region3
    $region8: #{tpu_custom_call.1} parent=1 // loop_exit
      _
    %416 = vsyncpa [#allocation3], 1
    %s417 = scalar_lea.sflag [#allocation3], 1
    %418 = vsyncpa %s417, 1
    %419 = vsyncpa [#allocation5], 1

</llo_original>
